<compile_context>
chip_gen: v5e
topology: v5e:2x2
jax: 0.10.0
libtpu: 0.0.40
codegen_flags: <defaults>
</compile_context>

<pallas_src>
import math

import jax
import jax.numpy as jnp
from jax.experimental import pallas as pl
from jax.experimental.pallas import tpu as pltpu


def _round_up(x, m):
    return ((x + m - 1) // m) * m


def _pick_h_tile(total, cap=256):
    """Largest multiple-of-8 divisor of `total` that is <= cap (total is a multiple of 8)."""
    best = 8
    t = 8
    while t <= min(total, cap):
        if total % t == 0:
            best = t
        t += 8
    return best


def _interp_matrix(in_size, out_size, dtype=jnp.float32):
    """Dense (out_size, in_size) 1-D linear interpolation matrix, align_corners=True."""
    if out_size == 1:
        src = jnp.zeros((1,), jnp.float32)
    else:
        src = jnp.arange(out_size, dtype=jnp.float32) * ((in_size - 1) / (out_size - 1))
    i0 = jnp.clip(jnp.floor(src), 0, in_size - 1).astype(jnp.int32)
    i1 = jnp.minimum(i0 + 1, in_size - 1)
    w1 = src - i0.astype(jnp.float32)
    w0 = 1.0 - w1
    rows = jnp.arange(out_size)
    A = jnp.zeros((out_size, in_size), dtype)
    A = A.at[rows, i0].add(w0.astype(dtype))
    A = A.at[rows, i1].add(w1.astype(dtype))
    return A


def _resize_kernel(x_ref, ah_ref, aw_ref, out_ref):
    # x_ref : (1, Hp_in, Wp_in)   one (batch*channel) image, VMEM-resident across H tiles
    # ah_ref: (TH, Hp_in)         rows of (factor * A_h) for this output H tile
    # aw_ref: (Wp_in, Wp_out)     W interpolation matrix
    # out_ref: (1, TH, Wp_out)
    x = x_ref[0]
    tmp = jnp.dot(ah_ref[...], x, preferred_element_type=jnp.float32)     # (TH, Wp_in)
    out = jnp.dot(tmp, aw_ref[...], preferred_element_type=jnp.float32)   # (TH, Wp_out)
    out_ref[0] = out.astype(out_ref.dtype)


def resize_transform(x, vel_resize):
    """Pallas equivalent of ResizeTransform(vel_resize, ndims=2).forward(x), x: (N, C, H, W)."""
    factor = 1.0 / vel_resize
    if factor == 1.0:
        return x

    N, C, H, W = x.shape
    H_out = int(math.floor(H * factor))
    W_out = int(math.floor(W * factor))

    # padded (sublane, lane)-aligned sizes
    Hp_in, Wp_in = _round_up(H, 8), _round_up(W, 128)
    Hp_out, Wp_out = _round_up(H_out, 8), _round_up(W_out, 128)
    TH = _pick_h_tile(Hp_out)

    # host-side (data independent) interpolation matrices; factor folded into A_h
    a_h = factor * _interp_matrix(H, H_out)                 # (H_out, H)
    a_w = _interp_matrix(W, W_out).T                        # (W, W_out)
    a_h = jnp.zeros((Hp_out, Hp_in), jnp.float32).at[:H_out, :H].set(a_h)
    a_w = jnp.zeros((Wp_in, Wp_out), jnp.float32).at[:W, :W_out].set(a_w)

    # merge batch and channel; zero-pad spatial dims to aligned sizes
    NC = N * C
    x_pad = jnp.zeros((NC, Hp_in, Wp_in), jnp.float32)
    x_pad = x_pad.at[:, :H, :W].set(x.reshape(NC, H, W).astype(jnp.float32))

    grid = (NC, Hp_out // TH)

    out = pl.pallas_call(
        _resize_kernel,
        out_shape=jax.ShapeDtypeStruct((NC, Hp_out, Wp_out), jnp.float32),
        grid_spec=pltpu.PrefetchScalarGridSpec(
            num_scalar_prefetch=0,
            grid=grid,
            in_specs=[
                # source image: invariant in the H-tile axis -> stays resident in VMEM
                pl.BlockSpec((1, Hp_in, Wp_in), lambda n, h: (n, 0, 0)),
                pl.BlockSpec((TH, Hp_in), lambda n, h: (h, 0)),
                pl.BlockSpec((Wp_in, Wp_out), lambda n, h: (0, 0)),
            ],
            out_specs=pl.BlockSpec((1, TH, Wp_out), lambda n, h: (n, h, 0)),
        ),
        compiler_params=pltpu.CompilerParams(
            dimension_semantics=("parallel", "parallel")),
    )(x_pad, a_h, a_w)

    out = out[:, :H_out, :W_out].reshape(N, C, H_out, W_out)
    return out.astype(x.dtype)


def _reference(x, vel_resize):
    """Pure-JAX reference of the PyTorch forward (bilinear, align_corners=True)."""
    factor = 1.0 / vel_resize
    if factor == 1.0:
        return x
    N, C, H, W = x.shape
    H_out = int(math.floor(H * factor))
    W_out = int(math.floor(W * factor))

    def coords(in_s, out_s):
        if out_s == 1:
            src = jnp.zeros((out_s,), jnp.float32)
        else:
            src = jnp.arange(out_s, dtype=jnp.float32) * ((in_s - 1) / (out_s - 1))
        i0 = jnp.clip(jnp.floor(src), 0, in_s - 1).astype(jnp.int32)
        i1 = jnp.minimum(i0 + 1, in_s - 1)
        w1 = src - i0.astype(jnp.float32)
        w0 = 1.0 - w1
        return i0, i1, w0, w1

    y0, y1, wy0, wy1 = coords(H, H_out)
    x0, x1, wx0, wx1 = coords(W, W_out)

    rows = (x[:, :, y0, :] * wy0[None, None, :, None]
            + x[:, :, y1, :] * wy1[None, None, :, None])          # (N, C, H_out, W)
    out = (rows[:, :, :, x0] * wx0[None, None, None, :]
           + rows[:, :, :, x1] * wx1[None, None, None, :])        # (N, C, H_out, W_out)
    return (factor * out).astype(x.dtype)


if __name__ == "__main__":
    key = jax.random.PRNGKey(0)
    N, C, H, W = 2, 2, 16, 16   # ndims=2 velocity field -> 2 channels
    x = jax.random.normal(key, (N, C, H, W), dtype=jnp.float32)

    # cover both branches: vel_resize=0.5 -> factor=2 (upsample), vel_resize=2 -> factor=0.5 (downsample)
    for vel_resize in (0.5, 2.0):
        out = resize_transform(x, vel_resize)
        out = jax.block_until_ready(out)
        ref = _reference(x, vel_resize)
        assert out.shape == ref.shape, (out.shape, ref.shape)
        err = float(jnp.max(jnp.abs(out - ref)))
        assert err < 1e-4, f"mismatch vs reference (vel_resize={vel_resize}, err={err})"

    print("KERNEL_OK")
</pallas_src>

<mosaic_0001>
module attributes {stable_mosaic.version = 11 : i64} {
  func.func @_resize_kernel(%arg0: i32, %arg1: i32, %arg2: memref<1x16x128xf32, #tpu.memory_space<vmem>>, %arg3: memref<32x16xf32, #tpu.memory_space<vmem>>, %arg4: memref<128x128xf32, #tpu.memory_space<vmem>>, %arg5: memref<1x32x128xf32, #tpu.memory_space<vmem>>) attributes {dimension_semantics = [#tpu.dimension_semantics<parallel>, #tpu.dimension_semantics<parallel>], iteration_bounds = array<i64: 4, 1>, scalar_prefetch = 0 : i64, scratch_operands = 0 : i64, tpu.core_type = #tpu.core_type<tc>, window_params = [{transform_indices = @transform_0, window_bounds = array<i64: 1, 16, 128>}, {transform_indices = @transform_1, window_bounds = array<i64: 32, 16>}, {pipeline_mode = #tpu.pipeline_mode<synchronous>, transform_indices = @transform_2, window_bounds = array<i64: 128, 128>}, {transform_indices = @transform_3, window_bounds = array<i64: 1, 32, 128>}]} {
    %c0 = arith.constant 0 : index
    %c0_0 = arith.constant 0 : index
    %c0_1 = arith.constant 0 : index
    %0 = vector.load %arg2[%c0, %c0_0, %c0_1] : memref<1x16x128xf32, #tpu.memory_space<vmem>>, vector<1x16x128xf32>
    %1 = vector.shape_cast %0 : vector<1x16x128xf32> to vector<16x128xf32>
    %c0_2 = arith.constant 0 : index
    %c0_3 = arith.constant 0 : index
    %2 = vector.load %arg3[%c0_2, %c0_3] : memref<32x16xf32, #tpu.memory_space<vmem>>, vector<32x16xf32>
    %cst = arith.constant dense<0.000000e+00> : vector<32x128xf32>
    %3 = tpu.matmul %2, %1, %cst {dimension_numbers = #tpu.dot_dimension_numbers<[1], [0], [0], [1], [0, 0, 1, 1], [], []>} : vector<32x16xf32>, vector<16x128xf32>, vector<32x128xf32> -> vector<32x128xf32>
    %c0_4 = arith.constant 0 : index
    %c0_5 = arith.constant 0 : index
    %4 = vector.load %arg4[%c0_4, %c0_5] : memref<128x128xf32, #tpu.memory_space<vmem>>, vector<128x128xf32>
    %cst_6 = arith.constant dense<0.000000e+00> : vector<32x128xf32>
    %5 = tpu.matmul %3, %4, %cst_6 {dimension_numbers = #tpu.dot_dimension_numbers<[1], [0], [0], [1], [0, 0, 1, 1], [], []>} : vector<32x128xf32>, vector<128x128xf32>, vector<32x128xf32> -> vector<32x128xf32>
    %c0_7 = arith.constant 0 : index
    %c0_8 = arith.constant 0 : index
    %c0_9 = arith.constant 0 : index
    %6 = vector.load %arg5[%c0_7, %c0_8, %c0_9] : memref<1x32x128xf32, #tpu.memory_space<vmem>>, vector<1x32x128xf32>
    %7 = vector.shape_cast %6 : vector<1x32x128xf32> to vector<32x128xf32>
    %8 = vector.shape_cast %5 : vector<32x128xf32> to vector<1x32x128xf32>
    tpu.vector_store %arg5[%c0_7, %c0_8, %c0_9], %8 {strides = array<i32>} : memref<1x32x128xf32, #tpu.memory_space<vmem>>, vector<1x32x128xf32>,
    return
  }
  func.func @transform_0(%arg0: i32, %arg1: i32) -> (i32, i32, i32) {
    %c0_i32 = arith.constant 0 : i32
    %c0_i32_0 = arith.constant 0 : i32
    %c0_i32_1 = arith.constant 0 : i32
    return %arg0, %c0_i32, %c0_i32_0 : i32, i32, i32
  }
  func.func @transform_1(%arg0: i32, %arg1: i32) -> (i32, i32) {
    %c0_i32 = arith.constant 0 : i32
    %c0_i32_0 = arith.constant 0 : i32
    return %arg1, %c0_i32 : i32, i32
  }
  func.func @transform_2(%arg0: i32, %arg1: i32) -> (i32, i32) {
    %c0_i32 = arith.constant 0 : i32
    %c0_i32_0 = arith.constant 0 : i32
    %c0_i32_1 = arith.constant 0 : i32
    return %c0_i32, %c0_i32_0 : i32, i32
  }
  func.func @transform_3(%arg0: i32, %arg1: i32) -> (i32, i32, i32) {
    %c0_i32 = arith.constant 0 : i32
    %c0_i32_0 = arith.constant 0 : i32
    return %arg0, %arg1, %c0_i32 : i32, i32, i32
  }
}

</mosaic_0001>

<llo_original>
// kernel: tpu_custom_call.1
$region0: #{tpu_custom_call.1}
  #allocation0 [shape = 'u32[]', space=smem, size = 0x4, offset = 0x4, fixed_abs, tag = 'smem constant byte address 0x4 - core index']
  #allocation1 [shape = 'u32[72,128]{1,0:T(1,128)}', space=vmem, size = 0x9000, scoped, tag = 'internal scratch']
  %s0 = inlined_call_operand.hbm [shape: f32[4,16,128], index: 0, kind: input, shape index: {}]
  %s1 = inlined_call_operand.vmem [shape: f32[32,16], index: 1, kind: input, shape index: {}]
  %s2 = inlined_call_operand.hbm [shape: f32[128,128], index: 2, kind: input, shape index: {}]
  %s3 = inlined_call_operand.hbm [shape: f32[4,32,128], index: 3, kind: output, shape index: {}]
  %s4 = sld [smem:[#allocation0]]
  $region53: #{tpu_custom_call.1} parent=0
    _
  %s6 = ssub.s32 1, %s4
  %s7 = scalar_select 0, %s6, %s4
  $region1: #{tpu_custom_call.1} parent=0
    #allocation2 [shape = 'u8[16384]{0}', space=vmem, size = 0x4000, scoped, tag = 'input window, operand 0']
    #allocation3 [shape = 's32[2]{0}', space=sflag, size = 0x8, scoped, tag = 'scoped memory for tpu_custom_call.1']
    #allocation4 [shape = 's32[2]{0}', space=sflag, size = 0x8, scoped, tag = 'scoped memory for tpu_custom_call.1']
    #allocation5 [shape = 'u8[65536]{0}', space=vmem, size = 0x10000, scoped, tag = 'input window, operand 2, single buffered']
    #allocation6 [shape = 's32[1]{0}', space=sflag, size = 0x4, scoped, tag = 'scoped memory for tpu_custom_call.1']
    #allocation7 [shape = 'u8[32768]{0}', space=vmem, size = 0x8000, scoped, tag = 'output window, operand 0']
    %8 = vsyncpa [#allocation3], 0
    %s9 = scalar_lea.sflag [#allocation3], 1
    %10 = vsyncpa %s9, 0
    %11 = vsyncpa [#allocation6], 0
    %12 = vsyncpa [#allocation4], 0
    %s13 = scalar_lea.sflag [#allocation4], 1
    %14 = vsyncpa %s13, 0
    loop: start=0, step=1, limit=6
    $region2: #{tpu_custom_call.1} parent=1 // loop_pre_header
      _
    $region3: #{tpu_custom_call.1} parent=1 // loop_header
      %s16 = sphi 0, %s20
      %p17 = scmp.ge.s32.totalorder %s16, 6
      %s23 = sphi 0, %s35
      %s24 = sphi 0, %s31
      %s25 = sphi 0, %s23
      %s26 = sphi 0, %s24
      %s27 = sphi 0, %s25
      %s28 = sphi 0, %s26
      %s38 = sphi 0, %s40
      %s41 = sphi 0, %s38
      %s42 = sphi 0, %s41
      %s58 = sphi 0, %s42
      %s64 = sphi 0, %s66
      %s67 = sphi 0, %s64
      %s68 = sphi 0, %s67
      %s84 = sphi 0, %s68
      %s88 = sphi 0, %s88
      %s90 = sphi 0, %s88
      %s91 = sphi 0, %s90
      %s105 = sphi 0, %s91
      %s113 = sphi 0, %s115
      %s116 = sphi 0, %s113
      %s117 = sphi 0, %s116
      %s133 = sphi 0, %s117
    $region4: #{tpu_custom_call.1} parent=1 // loop_header_branch
      %19 = sbr.rel (%p17) target = $region8
    $region5: #{tpu_custom_call.1} parent=1 // loop_body
      %s21 = ssub.s32 %s16, 1
      %s22 = ssub.s32 %s16, 2
      %s29 = sadd.s32 1, %s24
      %p30 = scmp.ge.s32.totalorder %s29, 1
      %s31 = scalar_select %p30, 0, %s29
      %s32 = sadd.s32 1, %s23
      %s33 = scalar_select %p30, %s32, %s23
      %p34 = scmp.ge.s32.totalorder %s33, 4
      %s35 = scalar_select %p34, 0, %s33
      %s36 = ssub.s32 %s23, %s35
      %p37 = scmp.eq.s32.totalorder %s36, 0
      %s39 = sadd.s32 %s38, 1
      %s40 = scalar_select %p37, %s38, %s39
      %p43 = pneg %p37
      %p44 = scmp.eq.s32.totalorder %s16, 3
      %p45 = por %p43, %p44
      %p46 = scmp.ne.s32.totalorder %s38, %s41
      %p47 = scmp.eq.s32.totalorder %s16, 0
      %p48 = por %p46, %p47
      %p49 = scmp.ne.s32.totalorder %s38, %s41
      %p50 = scmp.eq.s32.totalorder %s21, 3
      %p51 = por %p49, %p50
      %p52 = scmp.ne.s32.totalorder %s41, %s42
      %p53 = scmp.eq.s32.totalorder %s21, 0
      %p54 = por %p52, %p53
      %p55 = scmp.ne.s32.totalorder %s41, %s42
      %p56 = scmp.eq.s32.totalorder %s22, 3
      %p57 = por %p55, %p56
      %p59 = scmp.ne.s32.totalorder %s42, %s58
      %p60 = scmp.eq.s32.totalorder %s22, 0
      %p61 = por %p59, %p60
      %s62 = ssub.s32 %s24, %s31
      %p63 = scmp.eq.s32.totalorder %s62, 0
      %s65 = sadd.s32 %s64, 1
      %s66 = scalar_select %p63, %s64, %s65
      %p69 = pneg %p63
      %p70 = scmp.eq.s32.totalorder %s16, 3
      %p71 = por %p69, %p70
      %p72 = scmp.ne.s32.totalorder %s64, %s67
      %p73 = scmp.eq.s32.totalorder %s16, 0
      %p74 = por %p72, %p73
      %p75 = scmp.ne.s32.totalorder %s64, %s67
      %p76 = scmp.eq.s32.totalorder %s21, 3
      %p77 = por %p75, %p76
      %p78 = scmp.ne.s32.totalorder %s67, %s68
      %p79 = scmp.eq.s32.totalorder %s21, 0
      %p80 = por %p78, %p79
      %p81 = scmp.ne.s32.totalorder %s67, %s68
      %p82 = scmp.eq.s32.totalorder %s22, 3
      %p83 = por %p81, %p82
      %p85 = scmp.ne.s32.totalorder %s68, %s84
      %p86 = scmp.eq.s32.totalorder %s22, 0
      %p87 = por %p85, %p86
      %s89 = sadd.s32 %s88, 1
      %p92 = scmp.eq.s32.totalorder %s16, 3
      %p93 = scmp.ne.s32.totalorder %s88, %s90
      %p94 = scmp.eq.s32.totalorder %s16, 0
      %p95 = por %p93, %p94
      %p96 = scmp.ne.s32.totalorder %s88, %s90
      %p97 = scmp.eq.s32.totalorder %s21, 3
      %p98 = por %p96, %p97
      %p99 = scmp.ne.s32.totalorder %s90, %s91
      %p100 = scmp.eq.s32.totalorder %s21, 0
      %p101 = por %p99, %p100
      %p102 = scmp.ne.s32.totalorder %s90, %s91
      %p103 = scmp.eq.s32.totalorder %s22, 3
      %p104 = por %p102, %p103
      %p106 = scmp.ne.s32.totalorder %s91, %s105
      %p107 = scmp.eq.s32.totalorder %s22, 0
      %p108 = por %p106, %p107
      %s109 = ssub.s32 %s23, %s35
      %s110 = ssub.s32 %s24, %s31
      %s111 = sor.u32 %s109, %s110
      %p112 = scmp.eq.s32.totalorder %s111, 0
      %s114 = sadd.s32 %s113, 1
      %s115 = scalar_select %p112, %s113, %s114
      %p118 = pneg %p112
      %p119 = scmp.eq.s32.totalorder %s16, 3
      %p120 = por %p118, %p119
      %p121 = scmp.ne.s32.totalorder %s113, %s116
      %p122 = scmp.eq.s32.totalorder %s16, 0
      %p123 = por %p121, %p122
      %p124 = scmp.ne.s32.totalorder %s113, %s116
      %p125 = scmp.eq.s32.totalorder %s21, 3
      %p126 = por %p124, %p125
      %p127 = scmp.ne.s32.totalorder %s116, %s117
      %p128 = scmp.eq.s32.totalorder %s21, 0
      %p129 = por %p127, %p128
      %p130 = scmp.ne.s32.totalorder %s116, %s117
      %p131 = scmp.eq.s32.totalorder %s22, 3
      %p132 = por %p130, %p131
      %p134 = scmp.ne.s32.totalorder %s117, %s133
      %p135 = scmp.eq.s32.totalorder %s22, 0
      %p136 = por %p134, %p135
      %p137 = scmp.le.s32.totalorder 1, %s16
      %p138 = scmp.lt.s32.totalorder %s16, 5
      %p139 = pnand %p137, %p138
      %p140 = pneg %p139
      // Predicated region
      $region9: #{tpu_custom_call.1} parent=5 // pred_check
        _
      $region10: #{tpu_custom_call.1} parent=5 // pred_check_branch
        %142 = sbr.rel (%p139) target = $region12
      $region11: #{tpu_custom_call.1} parent=5 // pred_region
        %s143 = ssub.s32 %s16, 1
        // Predicated region
        $region13: #{tpu_custom_call.1} parent=11 // pred_check
          %p144 = pneg %p80
        $region14: #{tpu_custom_call.1} parent=11 // pred_check_branch
          %146 = sbr.rel (%p144) target = $region16
        $region15: #{tpu_custom_call.1} parent=11 // pred_region
          %s147 = smul.u32 4, %s26
          %p148 = scmp.lt.s32.totalorder %s147, 3
          %s149 = scalar_select %p148, %s147, 3
          %s150 = smul.addr %s149, 8
          %s151 = scalar_lea.vmem %s1, %s150
          %s152 = smul.u32 4, %s26
        $region16: #{tpu_custom_call.1} parent=11 // pred_fallthru
          _
        // Predicated region
        $region17: #{tpu_custom_call.1} parent=11 // pred_check
          %p153 = pneg %p101
        $region18: #{tpu_custom_call.1} parent=11 // pred_check_branch
          %155 = sbr.rel (%p153) target = $region20
        $region19: #{tpu_custom_call.1} parent=11 // pred_region
          %157 = vsyncadd [#allocation6], 0
          %s158 = sshll.u32 %s2, 4
          %s159 = int_to_ptr.hbm [resolvable:$true] %s158
          %s160 = sshll.u32 [#allocation5], 4
          %s161 = int_to_ptr.vmem [resolvable:$true] %s160
          %166 = dma.hbm_to_vmem [thread:$0]  %s159, 2048, %s161, [#allocation6], 128, 128, 8
        $region20: #{tpu_custom_call.1} parent=11 // pred_fallthru
          _
      $region12: #{tpu_custom_call.1} parent=5 // pred_fallthru
        _
      %p167 = scmp.lt.s32.totalorder %s16, 4
      // Predicated region
      $region21: #{tpu_custom_call.1} parent=5 // pred_check
        %p168 = pneg %p167
      $region22: #{tpu_custom_call.1} parent=5 // pred_check_branch
        %170 = sbr.rel (%p168) target = $region24
      $region23: #{tpu_custom_call.1} parent=5 // pred_region
        // Predicated region
        $region25: #{tpu_custom_call.1} parent=23 // pred_check
          %p171 = pneg %p48
        $region26: #{tpu_custom_call.1} parent=23 // pred_check_branch
          %173 = sbr.rel (%p171) target = $region28
        $region27: #{tpu_custom_call.1} parent=23 // pred_region
          %s174 = sand.u32 %s38, 1
          %s175 = scalar_lea.sflag [#allocation3], %s174
          %s176 = sand.u32 %s38, 1
          %s177 = smul.addr %s176, 16
          %s178 = scalar_lea.vmem [#allocation2], %s177
          %180 = vsyncadd %s175, 0
          %s181 = smul.addr %s23, 2
          %s182 = smul.addr %s181, 8
          %s183 = scalar_lea.hbm %s0, %s182
          %s184 = sshll.u32 %s183, 4
          %s185 = int_to_ptr.hbm [resolvable:$true] %s184
          %s186 = sshll.u32 %s178, 4
          %s187 = int_to_ptr.vmem [resolvable:$true] %s186
          %192 = dma.hbm_to_vmem [thread:$0]  %s185, 256, %s187, %s175, 128, 128, 8
        $region28: #{tpu_custom_call.1} parent=23 // pred_fallthru
          _
      $region24: #{tpu_custom_call.1} parent=5 // pred_fallthru
        _
      %p193 = scmp.le.s32.totalorder 1, %s16
      %p194 = scmp.lt.s32.totalorder %s16, 5
      %p195 = pnand %p193, %p194
      %p196 = pneg %p195
      // Predicated region
      $region29: #{tpu_custom_call.1} parent=5 // pred_check
        _
      $region30: #{tpu_custom_call.1} parent=5 // pred_check_branch
        %198 = sbr.rel (%p195) target = $region32
      $region31: #{tpu_custom_call.1} parent=5 // pred_region
        %s199 = ssub.s32 %s16, 1
        %s200 = sand.u32 %s41, 1
        %s201 = scalar_lea.sflag [#allocation3], %s200
        %s202 = sand.u32 %s41, 1
        %s203 = smul.addr %s202, 16
        %s204 = scalar_lea.vmem [#allocation2], %s203
        // Predicated region
        $region33: #{tpu_custom_call.1} parent=31 // pred_check
          %p205 = pneg %p54
        $region34: #{tpu_custom_call.1} parent=31 // pred_check_branch
          %207 = sbr.rel (%p205) target = $region36
        $region35: #{tpu_custom_call.1} parent=31 // pred_region
          %209 = dma.done %s201, 256
        $region36: #{tpu_custom_call.1} parent=31 // pred_fallthru
          _
        // Predicated region
        $region37: #{tpu_custom_call.1} parent=31 // pred_check
          %p210 = pneg %p101
        $region38: #{tpu_custom_call.1} parent=31 // pred_check_branch
          %212 = sbr.rel (%p210) target = $region40
        $region39: #{tpu_custom_call.1} parent=31 // pred_region
          %214 = dma.done [#allocation6], 2048
        $region40: #{tpu_custom_call.1} parent=31 // pred_fallthru
          _
        %s215 = sand.u32 %s41, 1
        %s216 = scalar_lea.sflag [#allocation3], %s215
        %s217 = sand.u32 %s41, 1
        %s218 = smul.addr %s217, 16
        %s219 = scalar_lea.vmem [#allocation2], %s218
        %p220 = pneg %p54
        %p221 = pneg %p51
        %s222 = smul.u32 4, %s26
        %p223 = scmp.lt.s32.totalorder %s222, 3
        %s224 = scalar_select %p223, %s222, 3
        %s225 = smul.addr %s224, 8
        %s226 = scalar_lea.vmem %s1, %s225
        %p227 = pneg %p80
        %p228 = pneg %p77
        %p229 = pneg %p101
        %p230 = pneg %p98
        %p231 = pneg %p129
        %p232 = pneg %p126
        %s233 = sand.u32 %s116, 1
        %s234 = scalar_lea.sflag [#allocation4], %s233
        %s235 = sand.u32 %s116, 1
        %s236 = smul.addr %s235, 32
        %s237 = scalar_lea.vmem [#allocation7], %s236
        %s238 = smul.u32 4, %s26
        %p239 = scmp.lt.s32.totalorder %s238, 3
        %s240 = scalar_select %p239, %s238, 3
        %s241 = smul.addr %s240, 8
        %s242 = scalar_lea.vmem %s1, %s241
        %s243 = smul.u32 4, %s26
        %s244 = smul.u32 4, %s26
        %v245 = vld [vmem:[%s204] sm:$0xff]
        %v246 = vld [vmem:[%s204 + $0x8] sm:$0xff]
        %v247 = vld [vmem:[%s242] sm:$0xff]
        %v248 = vld [vmem:[%s242 + $0x8] sm:$0xff]
        %v249 = vld [vmem:[%s242 + $0x10] sm:$0xff]
        %v250 = vld [vmem:[%s242 + $0x18] sm:$0xff]
        %vm251 = vcmask 130048
        %v253 = vsel %vm251, %v247, 0
        %v256 = vsel %vm251, %v248, 0
        %v259 = vsel %vm251, %v249, 0
        %v262 = vsel %vm251, %v250, 0
        %264 = vmatpush.msra.mxu0 0.0
        %265 = vmatpush.msra.mxu0 0.0
        %266 = vmatpush.msra.mxu0 0.0
        %267 = vmatpush.msra.mxu0 0.0
        %268 = vmatpush.msra.mxu0 0.0
        %269 = vmatpush.msra.mxu0 0.0
        %270 = vmatpush.msra.mxu0 0.0
        %271 = vmatpush.msra.mxu0 0.0
        %272 = vmatpush.msra.mxu0 0.0
        %273 = vmatpush.msra.mxu0 0.0
        %274 = vmatpush.msra.mxu0 0.0
        %275 = vmatpush.msra.mxu0 0.0
        %276 = vmatpush.msra.mxu0 0.0
        %277 = vmatpush.msra.mxu0 0.0
        %278 = vmatpush.msra.mxu0 %v246
        %279 = vmatpush.msra.mxu0 %v245
        %280 = vmatmul.f32.gmra.mxu0 %v253
        %v281 = vpop.f32.mrf.mxu0
        %v282 = vadd.f32 0.0, %v281
        %283 = vmatmul.f32.gmra.mxu0 %v256
        %v284 = vpop.f32.mrf.mxu0
        %v285 = vadd.f32 0.0, %v284
        %286 = vmatmul.f32.gmra.mxu0 %v259
        %v287 = vpop.f32.mrf.mxu0
        %v288 = vadd.f32 0.0, %v287
        %289 = vmatmul.f32.gmra.mxu0 %v262
        %v290 = vpop.f32.mrf.mxu0
        %v291 = vadd.f32 0.0, %v290
        %292 = vdwg.mxu0
        %v293 = vld [vmem:[#allocation5] sm:$0xff]
        %v294 = vld [vmem:[#allocation5 + $0x8] sm:$0xff]
        %v295 = vld [vmem:[#allocation5 + $0x10] sm:$0xff]
        %v296 = vld [vmem:[#allocation5 + $0x18] sm:$0xff]
        %v297 = vld [vmem:[#allocation5 + $0x20] sm:$0xff]
        %v298 = vld [vmem:[#allocation5 + $0x28] sm:$0xff]
        %v299 = vld [vmem:[#allocation5 + $0x30] sm:$0xff]
        %v300 = vld [vmem:[#allocation5 + $0x38] sm:$0xff]
        %v301 = vld [vmem:[#allocation5 + $0x40] sm:$0xff]
        %v302 = vld [vmem:[#allocation5 + $0x48] sm:$0xff]
        %v303 = vld [vmem:[#allocation5 + $0x50] sm:$0xff]
        %v304 = vld [vmem:[#allocation5 + $0x58] sm:$0xff]
        %v305 = vld [vmem:[#allocation5 + $0x60] sm:$0xff]
        %v306 = vld [vmem:[#allocation5 + $0x68] sm:$0xff]
        %v307 = vld [vmem:[#allocation5 + $0x70] sm:$0xff]
        %v308 = vld [vmem:[#allocation5 + $0x78] sm:$0xff]
        %309 = vmatpush.msra.mxu0 %v308
        %310 = vmatpush.msra.mxu0 %v307
        %311 = vmatpush.msra.mxu0 %v306
        %312 = vmatpush.msra.mxu0 %v305
        %313 = vmatpush.msra.mxu0 %v304
        %314 = vmatpush.msra.mxu0 %v303
        %315 = vmatpush.msra.mxu0 %v302
        %316 = vmatpush.msra.mxu0 %v301
        %317 = vmatpush.msra.mxu0 %v300
        %318 = vmatpush.msra.mxu0 %v299
        %319 = vmatpush.msra.mxu0 %v298
        %320 = vmatpush.msra.mxu0 %v297
        %321 = vmatpush.msra.mxu0 %v296
        %322 = vmatpush.msra.mxu0 %v295
        %323 = vmatpush.msra.mxu0 %v294
        %324 = vmatpush.msra.mxu0 %v293
        %325 = vmatmul.f32.gmra.mxu0 %v282
        %v326 = vpop.f32.mrf.mxu0
        %v327 = vadd.f32 0.0, %v326
        %328 = vmatmul.f32.gmra.mxu0 %v285
        %v329 = vpop.f32.mrf.mxu0
        %v330 = vadd.f32 0.0, %v329
        %331 = vmatmul.f32.gmra.mxu0 %v288
        %v332 = vpop.f32.mrf.mxu0
        %v333 = vadd.f32 0.0, %v332
        %334 = vmatmul.f32.gmra.mxu0 %v291
        %v335 = vpop.f32.mrf.mxu0
        %v336 = vadd.f32 0.0, %v335
        %337 = vdwg.mxu0
        %338 = vst [vmem:[%s237] sm:$0xff] %v327
        %339 = vst [vmem:[%s237 + $0x8] sm:$0xff] %v330
        %340 = vst [vmem:[%s237 + $0x10] sm:$0xff] %v333
        %341 = vst [vmem:[%s237 + $0x18] sm:$0xff] %v336
        %s342 = sand.u32 %s116, 1
        %s343 = scalar_lea.sflag [#allocation4], %s342
        %s344 = sand.u32 %s116, 1
        %s345 = smul.addr %s344, 32
        %s346 = scalar_lea.vmem [#allocation7], %s345
        // Predicated region
        $region41: #{tpu_custom_call.1} parent=31 // pred_check
          %p347 = pneg %p126
        $region42: #{tpu_custom_call.1} parent=31 // pred_check_branch
          %349 = sbr.rel (%p347) target = $region44
        $region43: #{tpu_custom_call.1} parent=31 // pred_region
          %s350 = smul.u32 4, %s26
          %352 = vsyncadd %s343, 0
          %s353 = smul.addr %s25, 4
          %s354 = sadd.s32 %s350, %s353
          %s355 = smul.addr %s354, 8
          %s356 = scalar_lea.hbm %s3, %s355
          %s357 = sshll.u32 %s346, 4
          %s358 = int_to_ptr.vmem [resolvable:$true] %s357
          %s359 = sshll.u32 %s356, 4
          %s360 = int_to_ptr.hbm [resolvable:$true] %s359
          %365 = dma.vmem_to_hbm [thread:$0]  %s358, 512, %s360, %s343, 128, 128, 8
        $region44: #{tpu_custom_call.1} parent=31 // pred_fallthru
          _
      $region32: #{tpu_custom_call.1} parent=5 // pred_fallthru
        _
      %p366 = scmp.le.s32.totalorder 2, %s16
      // Predicated region
      $region45: #{tpu_custom_call.1} parent=5 // pred_check
        %p367 = pneg %p366
      $region46: #{tpu_custom_call.1} parent=5 // pred_check_branch
        %369 = sbr.rel (%p367) target = $region48
      $region47: #{tpu_custom_call.1} parent=5 // pred_region
        %s370 = ssub.s32 %s16, 2
        // Predicated region
        $region49: #{tpu_custom_call.1} parent=47 // pred_check
          %p371 = pneg %p132
        $region50: #{tpu_custom_call.1} parent=47 // pred_check_branch
          %373 = sbr.rel (%p371) target = $region52
        $region51: #{tpu_custom_call.1} parent=47 // pred_region
          %s374 = sand.u32 %s117, 1
          %s375 = scalar_lea.sflag [#allocation4], %s374
          %s376 = sand.u32 %s117, 1
          %s377 = smul.addr %s376, 32
          %s378 = scalar_lea.vmem [#allocation7], %s377
          %380 = dma.done %s375, 512
        $region52: #{tpu_custom_call.1} parent=47 // pred_fallthru
          _
      $region48: #{tpu_custom_call.1} parent=5 // pred_fallthru
        _
    $region6: #{tpu_custom_call.1} parent=1 // loop_footer
      %s20 = sadd.s32 1, %s16
    $region7: #{tpu_custom_call.1} parent=1 // loop_footer_branch
      %15 = sbr.rel target = $region3
    $region8: #{tpu_custom_call.1} parent=1 // loop_exit
      _
    %381 = vsyncpa [#allocation3], 1
    %s382 = scalar_lea.sflag [#allocation3], 1
    %383 = vsyncpa %s382, 1
    %384 = vsyncpa [#allocation6], 1
    %385 = vsyncpa [#allocation4], 1
    %s386 = scalar_lea.sflag [#allocation4], 1
    %387 = vsyncpa %s386, 1

</llo_original>
